<compile_context>
chip_gen: v6e
topology: v6e:2x2x1
jax: 0.10.0
libtpu: 0.0.40
codegen_flags: <defaults>
</compile_context>

<pallas_src>
import functools
import math

import jax
import jax.numpy as jnp
from jax.experimental import pallas as pl
from jax.experimental.pallas import tpu as pltpu


_LANE = 128
_TARGET_BLOCK_BYTES = 1 << 20            # ~1 MiB of activation per grid step
_SUBLANE = {4: 8, 2: 16, 1: 32}          # native sublane multiple per itemsize


def _droppath_kernel(scale_ref, x_ref, o_ref):
    # scale_ref: (TR, 1) f32 per-row keep/scale; x_ref/o_ref: (TR, 128).
    # Multiply in f32, cast the product once.
    o_ref[...] = (x_ref[...].astype(jnp.float32) * scale_ref[...]).astype(o_ref.dtype)


def _droppath_residual_kernel(scale_ref, x_ref, r_ref, o_ref):
    # Fused surrounding residual add: out = residual + x * scale.
    o_ref[...] = (
        r_ref[...].astype(jnp.float32)
        + x_ref[...].astype(jnp.float32) * scale_ref[...]
    ).astype(o_ref.dtype)


def _flatten_rows(a, n_elem, padded, rows_pad):
    """(B, ...) -> (B*rows [+ rows_pad], 128) lane-dense slab with minimal padding."""
    B = a.shape[0]
    flat = a.reshape(B, n_elem)
    if padded != n_elem:
        flat = jnp.pad(flat, ((0, 0), (0, padded - n_elem)))
    flat = flat.reshape(B * (padded // _LANE), _LANE)
    if rows_pad:
        flat = jnp.pad(flat, ((0, rows_pad), (0, 0)))
    return flat


def drop_path(x, key, *, p, training=True, residual=None, block_rows=None):
    """Pallas TPU DropPath.forward (stochastic depth).

    If `residual` is given, returns `residual + drop_path(x)` in one fused
    kernel (one HBM round trip instead of two).
    """
    if (not training) or p == 0:
        return x if residual is None else x + residual
    if p >= 1.0:
        # keep_prob == 0: every sample dropped.  The PyTorch reference would
        # produce 0 * inf = NaN here; guard instead (like timm).
        return jnp.zeros_like(x) if residual is None else residual

    keep_prob = 1.0 - float(p)
    B = x.shape[0]
    n_elem = math.prod(x.shape[1:])
    itemsize = jnp.dtype(x.dtype).itemsize
    sublane = _SUBLANE.get(itemsize, 8)

    # Per-sample Bernoulli(keep_prob) keep decision -> per-sample f32 scale.
    keep = jax.random.bernoulli(key, keep_prob, (B,))
    sample_scale = keep.astype(jnp.float32) * (1.0 / keep_prob)          # (B,)

    # Flatten each sample into whole 128-lane rows (pad only to the next 128
    # multiple; skipped when aligned), then pad at most sublane-1 trailing
    # rows so the row axis is a legal sublane multiple.
    rows = pl.cdiv(n_elem, _LANE)            # rows per sample
    padded = rows * _LANE                    # per-sample padded element count
    total_rows = B * rows
    rows_pad = (-total_rows) % sublane
    total_rows_p = total_rows + rows_pad

    flat = _flatten_rows(x, n_elem, padded, rows_pad)
    res_flat = None
    if residual is not None:
        res_flat = _flatten_rows(residual.astype(x.dtype), n_elem, padded, rows_pad)

    # One scale per row (each sample contributes `rows` identical rows), so a
    # block may freely span sample boundaries.  Tiny side stream.
    row_scale = jnp.repeat(sample_scale, rows)
    if rows_pad:
        row_scale = jnp.pad(row_scale, (0, rows_pad))
    row_scale = row_scale.reshape(total_rows_p, 1)

    # Rows per block: ~1 MiB of activation per block regardless of dtype,
    # rounded to the dtype's native sublane multiple.  The last block may be
    # partial (Pallas masks OOB reads/writes).
    if block_rows is None:
        tr = _TARGET_BLOCK_BYTES // (_LANE * itemsize)
    else:
        tr = int(block_rows)
    tr = max(sublane, (tr // sublane) * sublane)
    tr = min(tr, total_rows_p)
    grid = (pl.cdiv(total_rows_p, tr),)

    data_spec = pl.BlockSpec((tr, _LANE), lambda i: (i, 0))
    scale_spec = pl.BlockSpec((tr, 1), lambda i: (i, 0))

    if residual is None:
        kernel = _droppath_kernel
        in_specs = [scale_spec, data_spec]
        operands = (row_scale, flat)
    else:
        kernel = _droppath_residual_kernel
        in_specs = [scale_spec, data_spec, data_spec]
        operands = (row_scale, flat, res_flat)

    act_streams = 1 if residual is None else 2
    cost = pl.CostEstimate(
        flops=act_streams * total_rows_p * _LANE,
        transcendentals=0,
        bytes_accessed=(act_streams + 1) * total_rows_p * _LANE * itemsize
        + total_rows_p * 4,
    )

    out = pl.pallas_call(
        kernel,
        out_shape=jax.ShapeDtypeStruct((total_rows_p, _LANE), x.dtype),
        grid=grid,
        in_specs=in_specs,
        out_specs=data_spec,
        compiler_params=pltpu.CompilerParams(
            # 1-D fully-parallel grid: enough independent steps to shard
            # across both TensorCores on v7x; near-neutral on v5e/v6e.
            dimension_semantics=("parallel",),
            vmem_limit_bytes=32 << 20,
        ),
        cost_estimate=cost,
    )(*operands)

    out = out[:total_rows].reshape(B, padded)
    if padded != n_elem:
        out = out[:, :n_elem]
    return out.reshape(x.shape)


if __name__ == "__main__":
    root = jax.random.PRNGKey(0)
    xkey, rkey, mkey, x2key = jax.random.split(root, 4)

    # Shapes implied by the module's use on conv feature maps: (B, C, H, W).
    x = jax.random.normal(xkey, (2, 4, 16, 16), dtype=jnp.float32)
    res = jax.random.normal(rkey, (2, 4, 16, 16), dtype=jnp.float32)

    p = 0.5
    keep_prob = 1.0 - p

    dp = jax.jit(functools.partial(drop_path, p=p, training=True))

    # 1) Plain DropPath (training).
    y = jax.block_until_ready(dp(x, mkey))
    keep = jax.random.bernoulli(mkey, keep_prob, (x.shape[0],))
    expect = x * (keep.astype(jnp.float32) / keep_prob).reshape(-1, 1, 1, 1)
    assert bool(jnp.allclose(y, expect, rtol=1e-6, atol=1e-6)), "drop_path mismatch"

    # 2) Fused residual add.
    yr = jax.block_until_ready(dp(x, mkey, residual=res))
    assert bool(jnp.allclose(yr, res + expect, rtol=1e-6, atol=1e-6)), "fused residual mismatch"

    # 3) Ragged shape (n_elem not a multiple of 128) with a forced small block
    #    so the grid has multiple steps (exercises padding + multi-block path).
    x2 = jax.random.normal(x2key, (3, 5, 7, 9), dtype=jnp.float32)
    dp2 = jax.jit(functools.partial(drop_path, p=0.3, training=True, block_rows=8))
    y2 = jax.block_until_ready(dp2(x2, mkey))
    keep2 = jax.random.bernoulli(mkey, 0.7, (x2.shape[0],))
    expect2 = x2 * (keep2.astype(jnp.float32) / 0.7).reshape(-1, 1, 1, 1)
    assert bool(jnp.allclose(y2, expect2, rtol=1e-6, atol=1e-6)), "ragged case mismatch"

    # 4) bf16 path (dtype-aware sublane rounding; f32 multiply then cast).
    x3 = x.astype(jnp.bfloat16)
    y3 = jax.block_until_ready(dp(x3, mkey))
    expect3 = (
        x3.astype(jnp.float32)
        * (keep.astype(jnp.float32) / keep_prob).reshape(-1, 1, 1, 1)
    ).astype(jnp.bfloat16)
    assert bool(
        jnp.allclose(y3.astype(jnp.float32), expect3.astype(jnp.float32), rtol=1e-2, atol=1e-2)
    ), "bf16 mismatch"

    # 5) Eval / p==0 identity and p==1 guard (no kernel launch).
    assert bool(jnp.array_equal(drop_path(x, mkey, p=p, training=False), x))
    assert bool(jnp.array_equal(drop_path(x, mkey, p=0.0, training=True), x))
    assert bool(jnp.all(drop_path(x, mkey, p=1.0, training=True) == 0.0))

    print("KERNEL_OK")
</pallas_src>

<mosaic_0001>
module attributes {stable_mosaic.version = 11 : i64} {
  func.func @_droppath_kernel(%arg0: i32, %arg1: memref<16x1xf32, #tpu.memory_space<vmem>>, %arg2: memref<16x128xf32, #tpu.memory_space<vmem>>, %arg3: memref<16x128xf32, #tpu.memory_space<vmem>>) attributes {dimension_semantics = [#tpu.dimension_semantics<parallel>], iteration_bounds = array<i64: 1>, scalar_prefetch = 0 : i64, scratch_operands = 0 : i64, tpu.core_type = #tpu.core_type<tc>, window_params = [{transform_indices = @transform_0, window_bounds = array<i64: 16, 1>}, {transform_indices = @transform_1, window_bounds = array<i64: 16, 128>}, {transform_indices = @transform_2, window_bounds = array<i64: 16, 128>}]} {
    %c0 = arith.constant 0 : index
    %c0_0 = arith.constant 0 : index
    %0 = vector.load %arg2[%c0, %c0_0] : memref<16x128xf32, #tpu.memory_space<vmem>>, vector<16x128xf32>
    %c0_1 = arith.constant 0 : index
    %c0_2 = arith.constant 0 : index
    %1 = vector.load %arg1[%c0_1, %c0_2] : memref<16x1xf32, #tpu.memory_space<vmem>>, vector<16x1xf32>
    %2 = vector.broadcast %1 : vector<16x1xf32> to vector<16x128xf32>
    %3 = arith.mulf %0, %2 : vector<16x128xf32>
    %c0_3 = arith.constant 0 : index
    %c0_4 = arith.constant 0 : index
    %4 = vector.load %arg3[%c0_3, %c0_4] : memref<16x128xf32, #tpu.memory_space<vmem>>, vector<16x128xf32>
    tpu.vector_store %arg3[%c0_3, %c0_4], %3 {strides = array<i32>} : memref<16x128xf32, #tpu.memory_space<vmem>>, vector<16x128xf32>,
    return
  }
  func.func @transform_0(%arg0: i32) -> (i32, i32) {
    %c0_i32 = arith.constant 0 : i32
    %c0_i32_0 = arith.constant 0 : i32
    return %arg0, %c0_i32 : i32, i32
  }
  func.func @transform_1(%arg0: i32) -> (i32, i32) {
    %c0_i32 = arith.constant 0 : i32
    %c0_i32_0 = arith.constant 0 : i32
    return %arg0, %c0_i32 : i32, i32
  }
  func.func @transform_2(%arg0: i32) -> (i32, i32) {
    %c0_i32 = arith.constant 0 : i32
    %c0_i32_0 = arith.constant 0 : i32
    return %arg0, %c0_i32 : i32, i32
  }
}

</mosaic_0001>

<llo_original>
// kernel: drop_path.1
$region0: #{drop_path.1}
  #allocation0 [shape = 'u32[]', space=smem, size = 0x4, offset = 0x4, fixed_abs, tag = 'smem constant byte address 0x4 - core index']
  #allocation1 [shape = 'u32[144,128]{1,0:T(1,128)}', space=vmem, size = 0x12000, scoped, tag = 'internal scratch']
  %s0 = inlined_call_operand.vmem [shape: f32[16,1], index: 0, kind: input, shape index: {}]
  %s1 = inlined_call_operand.vmem [shape: f32[16,128], index: 1, kind: input, shape index: {}]
  %s2 = inlined_call_operand.vmem [shape: f32[16,128], index: 2, kind: output, shape index: {}]
  %s3 = sld [smem:[#allocation0]]
  $region18: #{drop_path.1} parent=0
    _
  %s5 = ssub.s32 1, %s3
  %s6 = scalar_select 0, %s5, %s3
  // Predicated region
  $region2: #{drop_path.1} parent=0 // pred_check
    _
  $region3: #{drop_path.1} parent=0 // pred_check_branch
    %8 = sbr.rel (0) target = $region5
  $region4: #{drop_path.1} parent=0 // pred_region
    _
  $region5: #{drop_path.1} parent=0 // pred_fallthru
    _
  // Predicated region
  $region6: #{drop_path.1} parent=0 // pred_check
    _
  $region7: #{drop_path.1} parent=0 // pred_check_branch
    %10 = sbr.rel (0) target = $region9
  $region8: #{drop_path.1} parent=0 // pred_region
    _
  $region9: #{drop_path.1} parent=0 // pred_fallthru
    _
  %v11 = vld [vmem:[%s1] sm:$0xff]
  %v12 = vld [vmem:[%s1 + $0x8] sm:$0xff]
  %v13 = vld [vmem:[%s0] sm:$0xff]
  %v14 = vld [vmem:[%s0 + $0x8] sm:$0xff]
  %16 = vset.pattern.permute.xlu0 0
  %17 = vperm.xlu0 %16, %v13
  %v18 = vpop.permute.xlu0 %17
  %21 = vset.pattern.permute.xlu0 0
  %22 = vperm.xlu0 %21, %v14
  %v23 = vpop.permute.xlu0 %22
  %v25 = vmul.f32 %v11, %v18
  %v26 = vmul.f32 %v12, %v23
  %27 = vst [vmem:[%s2] sm:$0xff] %v25
  %28 = vst [vmem:[%s2 + $0x8] sm:$0xff] %v26
  // Predicated region
  $region10: #{drop_path.1} parent=0 // pred_check
    _
  $region11: #{drop_path.1} parent=0 // pred_check_branch
    %30 = sbr.rel (0) target = $region13
  $region12: #{drop_path.1} parent=0 // pred_region
    _
  $region13: #{drop_path.1} parent=0 // pred_fallthru
    _
  // Predicated region
  $region14: #{drop_path.1} parent=0 // pred_check
    _
  $region15: #{drop_path.1} parent=0 // pred_check_branch
    %32 = sbr.rel (0) target = $region17
  $region16: #{drop_path.1} parent=0 // pred_region
    _
  $region17: #{drop_path.1} parent=0 // pred_fallthru
    _

</llo_original>
